<compile_context>
chip_gen: v7x
topology: tpu7x:2x2x1
jax: 0.10.0
libtpu: 0.0.40
codegen_flags: <defaults>
</compile_context>

<pallas_src>
import functools

import jax
import jax.numpy as jnp
from jax.experimental import pallas as pl
from jax.experimental.pallas import tpu as pltpu

GP_WEIGHT = 1.0      # gp_weight of the module
NEG_SLOPE = 0.2      # LeakyReLU slope of the synthetic discriminator


def _round_up(x, m):
    return ((x + m - 1) // m) * m


def _gp_kernel(alpha_ref, real_ref, gen_ref, w1_ref, b1_ref, w2_ref, w2s_ref,
               g_ref, out_ref, h_acc):
    d = pl.program_id(1)
    nd = pl.num_programs(1)

    @pl.when(d == 0)
    def _init_h():
        # start the accumulator at the bias (added exactly once)
        h_acc[...] = jnp.broadcast_to(b1_ref[...], h_acc.shape)

    alpha = alpha_ref[...]                                   # (TB, 1)  f32
    real = real_ref[...].astype(jnp.float32)                 # (TB, TD) f32
    gen = gen_ref[...].astype(jnp.float32)
    x = alpha * real + (1.0 - alpha) * gen                   # interpolation (f32, VPU)
    # h += x @ W1  (bf16 MXU operands, f32 accumulation)
    h_acc[...] += jnp.dot(x.astype(w1_ref.dtype), w1_ref[...],
                          preferred_element_type=jnp.float32)

    @pl.when(d == nd - 1)
    def _finalize():
        h = h_acc[...]                                        # (TB, HP) f32
        # lrelu'(h) * w2  ==  where(h > 0, w2, slope * w2)  (slope branch at h==0,
        # matching PyTorch's leaky_relu backward); computed once per batch tile.
        gbar = jnp.where(h > 0.0, w2_ref[...], w2s_ref[...])  # (TB, HP) f32
        # ||grad_i||^2 = gbar_i @ G @ gbar_i^T  with G = W1^T W1 (f32, 128x128)
        gG = jnp.dot(gbar, g_ref[...], preferred_element_type=jnp.float32)
        ss = jnp.sum(gG * gbar, axis=1, keepdims=True)        # (TB, 1)
        gnorm = jnp.sqrt(ss + 1e-12)                          # matches torch reference
        pen = (gnorm - 1.0) ** 2
        out_ref[...] = jnp.broadcast_to(pen, out_ref.shape)


def gradient_penalty(gen, real, w1, b1, w2, alpha, *, gp_weight=GP_WEIGHT,
                     block_d=2048, batch_cap=256):
    """gen, real: [B, C, H, W]; alpha: [B, 1, 1, 1]; w1: (D, HID); returns scalar."""
    bs = real.shape[0]
    real_flat = real.reshape(bs, -1)
    gen_flat = gen.reshape(bs, -1)
    d_feat, hid = w1.shape

    # --- tile / padded sizes ------------------------------------------------
    # Batch: bound padding waste while keeping TB a sublane multiple (<= 256 for
    # the 256-wide v6e/v7x MXU and to limit the per-batch-tile W1 restream).
    n_b = -(-bs // batch_cap)
    TB = _round_up(-(-bs // n_b), 8)
    b_pad = n_b * TB
    # Hidden: lane-dense.
    HP = _round_up(hid, 128)
    # Feature: large tiles to amortize the ~0.35us/step pipeline overhead, sized
    # to minimize padding and to divide d_pad exactly.
    n_d = -(-d_feat // block_d)
    TD = _round_up(-(-d_feat // n_d), 128)
    d_pad = n_d * TD

    f32, bf16 = jnp.float32, jnp.bfloat16

    def pad2(x, rows, cols):
        pr, pc = rows - x.shape[0], cols - x.shape[1]
        if pr == 0 and pc == 0:
            return x
        return jnp.pad(x, ((0, pr), (0, pc)))

    # heavy operands in bf16 (halved HBM traffic, bf16 MXU); small params in f32
    real_p = pad2(real_flat, b_pad, d_pad).astype(bf16)
    gen_p = pad2(gen_flat, b_pad, d_pad).astype(bf16)
    alpha_p = pad2(alpha.reshape(bs, 1).astype(f32), b_pad, 1)
    w1_f32 = pad2(w1.astype(f32), d_pad, HP)
    w1_p = w1_f32.astype(bf16)                     # (d_pad, HP)  for x @ W1
    b1_p = pad2(b1.astype(f32).reshape(1, -1), 1, HP)
    w2_p = pad2(w2.astype(f32).reshape(1, -1), 1, HP)
    w2s_p = NEG_SLOPE * w2_p                       # precomputed slope * w2
    # Gram matrix G = W1^T W1 in f32 (128x128): replaces the whole W1^T stream.
    g_p = jnp.dot(w1_f32.T, w1_f32, preferred_element_type=f32)

    grid_spec = pltpu.PrefetchScalarGridSpec(
        num_scalar_prefetch=0,
        grid=(n_b, n_d),
        in_specs=[
            pl.BlockSpec((TB, 1), lambda i, d: (i, 0)),       # alpha
            pl.BlockSpec((TB, TD), lambda i, d: (i, d)),      # real
            pl.BlockSpec((TB, TD), lambda i, d: (i, d)),      # gen
            pl.BlockSpec((TD, HP), lambda i, d: (d, 0)),      # W1
            pl.BlockSpec((1, HP), lambda i, d: (0, 0)),       # b1
            pl.BlockSpec((1, HP), lambda i, d: (0, 0)),       # w2
            pl.BlockSpec((1, HP), lambda i, d: (0, 0)),       # slope * w2
            pl.BlockSpec((HP, HP), lambda i, d: (0, 0)),      # G = W1^T W1
        ],
        out_specs=pl.BlockSpec((TB, 128), lambda i, d: (i, 0)),
        scratch_shapes=[
            pltpu.VMEM((TB, HP), jnp.float32),   # resident h accumulator
        ],
    )

    # Advisory cost: includes the n_b-fold re-streaming of W1 per batch tile.
    cost = pl.CostEstimate(
        flops=int(2 * b_pad * d_pad * HP + 4 * b_pad * d_pad
                  + 2 * b_pad * HP * HP + 4 * b_pad * HP),
        transcendentals=int(b_pad),
        bytes_accessed=int(2 * b_pad * d_pad * 2          # real + gen (bf16)
                           + n_b * d_pad * HP * 2         # W1 restream (bf16)
                           + n_b * HP * HP * 4            # G per batch tile
                           + b_pad * (128 + 1) * 4),      # out + alpha
    )

    out = pl.pallas_call(
        _gp_kernel,
        out_shape=jax.ShapeDtypeStruct((b_pad, 128), jnp.float32),
        grid_spec=grid_spec,
        compiler_params=pltpu.CompilerParams(
            dimension_semantics=("parallel", "arbitrary"),
            vmem_limit_bytes=32 * 1024 * 1024,   # safe budget on v5e/v6e/v7x
        ),
        cost_estimate=cost,
    )(alpha_p, real_p, gen_p, w1_p, b1_p, w2_p, w2s_p, g_p)

    # per-sample (||grad|| - 1)^2 sits (lane-broadcast) in each valid row
    return gp_weight * jnp.mean(out[:bs, 0])


# Jitted entry point: fuses the pad/cast/Gram prep with the kernel launch so the
# wrapper does not cost a separate eager HBM pass over real/gen.
gradient_penalty_jit = jax.jit(
    functools.partial(gradient_penalty, gp_weight=GP_WEIGHT))


if __name__ == "__main__":
    key = jax.random.PRNGKey(0)
    k_gen, k_real, k_alpha, k_w1, k_b1, k_w2 = jax.random.split(key, 6)

    B, C, H, W = 2, 4, 16, 16          # NCHW, as in the PyTorch module
    D = C * H * W                      # 1024 flattened features
    HID = 32                           # hidden width of the synthetic discriminator

    gen = jax.random.normal(k_gen, (B, C, H, W), dtype=jnp.float32)
    real = jax.random.normal(k_real, (B, C, H, W), dtype=jnp.float32)
    # alpha = torch.rand(bs, 1, 1, 1) equivalent (sampled on host for determinism)
    alpha = jax.random.uniform(k_alpha, (B, 1, 1, 1), dtype=jnp.float32)

    # Deterministic synthetic discriminator parameters.
    w1 = jax.random.normal(k_w1, (D, HID), dtype=jnp.float32) * 0.05
    b1 = jax.random.normal(k_b1, (1, HID), dtype=jnp.float32) * 0.05
    w2 = jax.random.normal(k_w2, (1, HID), dtype=jnp.float32) * 0.05
    # (output bias b2 of the discriminator does not affect the gradient penalty)

    penalty = gradient_penalty_jit(gen, real, w1, b1, w2, alpha)
    jax.block_until_ready(penalty)
    print("KERNEL_OK")
</pallas_src>

<mosaic_0001>
module attributes {stable_mosaic.version = 11 : i64} {
  func.func @_gp_kernel(%arg0: i32, %arg1: i32, %arg2: memref<8x1xf32, #tpu.memory_space<vmem>>, %arg3: memref<8x1024xbf16, #tpu.memory_space<vmem>>, %arg4: memref<8x1024xbf16, #tpu.memory_space<vmem>>, %arg5: memref<1024x128xbf16, #tpu.memory_space<vmem>>, %arg6: memref<1x128xf32, #tpu.memory_space<vmem>>, %arg7: memref<1x128xf32, #tpu.memory_space<vmem>>, %arg8: memref<1x128xf32, #tpu.memory_space<vmem>>, %arg9: memref<128x128xf32, #tpu.memory_space<vmem>>, %arg10: memref<8x128xf32, #tpu.memory_space<vmem>>, %arg11: memref<8x128xf32, #tpu.memory_space<vmem>>) attributes {dimension_semantics = [#tpu.dimension_semantics<parallel>, #tpu.dimension_semantics<arbitrary>], iteration_bounds = array<i64: 1, 1>, scalar_prefetch = 0 : i64, scratch_operands = 1 : i64, tpu.core_type = #tpu.core_type<tc>, window_params = [{transform_indices = @transform_0, window_bounds = array<i64: 8, 1>}, {transform_indices = @transform_1, window_bounds = array<i64: 8, 1024>}, {transform_indices = @transform_2, window_bounds = array<i64: 8, 1024>}, {transform_indices = @transform_3, window_bounds = array<i64: 1024, 128>}, {pipeline_mode = #tpu.pipeline_mode<synchronous>, transform_indices = @transform_4, window_bounds = array<i64: 1, 128>}, {pipeline_mode = #tpu.pipeline_mode<synchronous>, transform_indices = @transform_5, window_bounds = array<i64: 1, 128>}, {pipeline_mode = #tpu.pipeline_mode<synchronous>, transform_indices = @transform_6, window_bounds = array<i64: 1, 128>}, {pipeline_mode = #tpu.pipeline_mode<synchronous>, transform_indices = @transform_7, window_bounds = array<i64: 128, 128>}, {transform_indices = @transform_8, window_bounds = array<i64: 8, 128>}]} {
    %c0_i32 = arith.constant 0 : i32
    %0 = arith.cmpi eq, %arg1, %c0_i32 : i32
    %1 = arith.extui %0 : i1 to i32
    %c0_i32_0 = arith.constant 0 : i32
    %2 = arith.cmpi ne, %1, %c0_i32_0 : i32
    scf.if %2 {
      %c0_15 = arith.constant 0 : index
      %c0_16 = arith.constant 0 : index
      %24 = vector.load %arg6[%c0_15, %c0_16] : memref<1x128xf32, #tpu.memory_space<vmem>>, vector<1x128xf32>
      %25 = vector.shape_cast %24 : vector<1x128xf32> to vector<1x128xf32>
      %26 = vector.broadcast %25 : vector<1x128xf32> to vector<8x128xf32>
      %c0_17 = arith.constant 0 : index
      %c0_18 = arith.constant 0 : index
      %27 = vector.load %arg11[%c0_17, %c0_18] : memref<8x128xf32, #tpu.memory_space<vmem>>, vector<8x128xf32>
      tpu.vector_store %arg11[%c0_17, %c0_18], %26 {strides = array<i32>} : memref<8x128xf32, #tpu.memory_space<vmem>>, vector<8x128xf32>,
    } else {
    }
    %c0 = arith.constant 0 : index
    %c0_1 = arith.constant 0 : index
    %3 = vector.load %arg2[%c0, %c0_1] : memref<8x1xf32, #tpu.memory_space<vmem>>, vector<8x1xf32>
    %c0_2 = arith.constant 0 : index
    %c0_3 = arith.constant 0 : index
    %4 = vector.load %arg3[%c0_2, %c0_3] : memref<8x1024xbf16, #tpu.memory_space<vmem>>, vector<8x1024xbf16>
    %5 = arith.extf %4 : vector<8x1024xbf16> to vector<8x1024xf32>
    %c0_4 = arith.constant 0 : index
    %c0_5 = arith.constant 0 : index
    %6 = vector.load %arg4[%c0_4, %c0_5] : memref<8x1024xbf16, #tpu.memory_space<vmem>>, vector<8x1024xbf16>
    %7 = arith.extf %6 : vector<8x1024xbf16> to vector<8x1024xf32>
    %8 = vector.broadcast %3 : vector<8x1xf32> to vector<8x1024xf32>
    %9 = arith.mulf %8, %5 : vector<8x1024xf32>
    %cst = arith.constant 1.000000e+00 : f32
    %10 = vector.broadcast %cst : f32 to vector<8x1xf32>
    %11 = arith.subf %10, %3 : vector<8x1xf32>
    %12 = vector.broadcast %11 : vector<8x1xf32> to vector<8x1024xf32>
    %13 = arith.mulf %12, %7 : vector<8x1024xf32>
    %14 = arith.addf %9, %13 : vector<8x1024xf32>
    %c0_6 = arith.constant 0 : index
    %c0_7 = arith.constant 0 : index
    %15 = vector.load %arg11[%c0_6, %c0_7] : memref<8x128xf32, #tpu.memory_space<vmem>>, vector<8x128xf32>
    %16 = arith.truncf %14 : vector<8x1024xf32> to vector<8x1024xbf16>
    %c0_8 = arith.constant 0 : index
    %c0_9 = arith.constant 0 : index
    %17 = vector.load %arg5[%c0_8, %c0_9] : memref<1024x128xbf16, #tpu.memory_space<vmem>>, vector<1024x128xbf16>
    %cst_10 = arith.constant dense<0.000000e+00> : vector<8x128xf32>
    %18 = tpu.matmul %16, %17, %cst_10 {dimension_numbers = #tpu.dot_dimension_numbers<[1], [0], [0], [1], [0, 0, 1, 1], [], []>} : vector<8x1024xbf16>, vector<1024x128xbf16>, vector<8x128xf32> -> vector<8x128xf32>
    %19 = arith.addf %15, %18 : vector<8x128xf32>
    %c0_11 = arith.constant 0 : index
    %c0_12 = arith.constant 0 : index
    %20 = vector.load %arg11[%c0_11, %c0_12] : memref<8x128xf32, #tpu.memory_space<vmem>>, vector<8x128xf32>
    tpu.vector_store %arg11[%c0_11, %c0_12], %19 {strides = array<i32>} : memref<8x128xf32, #tpu.memory_space<vmem>>, vector<8x128xf32>,
    %c0_i32_13 = arith.constant 0 : i32
    %21 = arith.cmpi eq, %arg1, %c0_i32_13 : i32
    %22 = arith.extui %21 : i1 to i32
    %c0_i32_14 = arith.constant 0 : i32
    %23 = arith.cmpi ne, %22, %c0_i32_14 : i32
    scf.if %23 {
      %c0_15 = arith.constant 0 : index
      %c0_16 = arith.constant 0 : index
      %24 = vector.load %arg11[%c0_15, %c0_16] : memref<8x128xf32, #tpu.memory_space<vmem>>, vector<8x128xf32>
      %cst_17 = arith.constant 0.000000e+00 : f32
      %25 = vector.broadcast %cst_17 : f32 to vector<8x128xf32>
      %26 = arith.cmpf ogt, %24, %25 : vector<8x128xf32>
      %c0_18 = arith.constant 0 : index
      %c0_19 = arith.constant 0 : index
      %27 = vector.load %arg7[%c0_18, %c0_19] : memref<1x128xf32, #tpu.memory_space<vmem>>, vector<1x128xf32>
      %c0_20 = arith.constant 0 : index
      %c0_21 = arith.constant 0 : index
      %28 = vector.load %arg8[%c0_20, %c0_21] : memref<1x128xf32, #tpu.memory_space<vmem>>, vector<1x128xf32>
      %29 = vector.shape_cast %27 : vector<1x128xf32> to vector<1x128xf32>
      %30 = vector.broadcast %29 : vector<1x128xf32> to vector<8x128xf32>
      %31 = vector.shape_cast %28 : vector<1x128xf32> to vector<1x128xf32>
      %32 = vector.broadcast %31 : vector<1x128xf32> to vector<8x128xf32>
      %33 = arith.select %26, %30, %32 : vector<8x128xi1>, vector<8x128xf32>
      %c0_22 = arith.constant 0 : index
      %c0_23 = arith.constant 0 : index
      %34 = vector.load %arg9[%c0_22, %c0_23] : memref<128x128xf32, #tpu.memory_space<vmem>>, vector<128x128xf32>
      %cst_24 = arith.constant dense<0.000000e+00> : vector<8x128xf32>
      %35 = tpu.matmul %33, %34, %cst_24 {dimension_numbers = #tpu.dot_dimension_numbers<[1], [0], [0], [1], [0, 0, 1, 1], [], []>} : vector<8x128xf32>, vector<128x128xf32>, vector<8x128xf32> -> vector<8x128xf32>
      %36 = arith.mulf %35, %33 : vector<8x128xf32>
      %cst_25 = arith.constant dense<0.000000e+00> : vector<8xf32>
      %37 = vector.multi_reduction <add>, %36, %cst_25 [1] : vector<8x128xf32> to vector<8xf32>
      %38 = vector.shape_cast %37 : vector<8xf32> to vector<8x1xf32>
      %cst_26 = arith.constant 9.99999996E-13 : f32
      %39 = vector.broadcast %cst_26 : f32 to vector<8x1xf32>
      %40 = arith.addf %38, %39 : vector<8x1xf32>
      %41 = math.sqrt %40 : vector<8x1xf32>
      %cst_27 = arith.constant 1.000000e+00 : f32
      %42 = vector.broadcast %cst_27 : f32 to vector<8x1xf32>
      %43 = arith.subf %41, %42 : vector<8x1xf32>
      %44 = arith.mulf %43, %43 : vector<8x1xf32>
      %45 = vector.shape_cast %44 : vector<8x1xf32> to vector<8x1xf32>
      %46 = vector.broadcast %45 : vector<8x1xf32> to vector<8x128xf32>
      %c0_28 = arith.constant 0 : index
      %c0_29 = arith.constant 0 : index
      %47 = vector.load %arg10[%c0_28, %c0_29] : memref<8x128xf32, #tpu.memory_space<vmem>>, vector<8x128xf32>
      tpu.vector_store %arg10[%c0_28, %c0_29], %46 {strides = array<i32>} : memref<8x128xf32, #tpu.memory_space<vmem>>, vector<8x128xf32>,
    } else {
    }
    return
  }
  func.func @transform_0(%arg0: i32, %arg1: i32) -> (i32, i32) {
    %c0_i32 = arith.constant 0 : i32
    %c0_i32_0 = arith.constant 0 : i32
    return %arg0, %c0_i32 : i32, i32
  }
  func.func @transform_1(%arg0: i32, %arg1: i32) -> (i32, i32) {
    %c0_i32 = arith.constant 0 : i32
    return %arg0, %arg1 : i32, i32
  }
  func.func @transform_2(%arg0: i32, %arg1: i32) -> (i32, i32) {
    %c0_i32 = arith.constant 0 : i32
    return %arg0, %arg1 : i32, i32
  }
  func.func @transform_3(%arg0: i32, %arg1: i32) -> (i32, i32) {
    %c0_i32 = arith.constant 0 : i32
    %c0_i32_0 = arith.constant 0 : i32
    return %arg1, %c0_i32 : i32, i32
  }
  func.func @transform_4(%arg0: i32, %arg1: i32) -> (i32, i32) {
    %c0_i32 = arith.constant 0 : i32
    %c0_i32_0 = arith.constant 0 : i32
    %c0_i32_1 = arith.constant 0 : i32
    return %c0_i32, %c0_i32_0 : i32, i32
  }
  func.func @transform_5(%arg0: i32, %arg1: i32) -> (i32, i32) {
    %c0_i32 = arith.constant 0 : i32
    %c0_i32_0 = arith.constant 0 : i32
    %c0_i32_1 = arith.constant 0 : i32
    return %c0_i32, %c0_i32_0 : i32, i32
  }
  func.func @transform_6(%arg0: i32, %arg1: i32) -> (i32, i32) {
    %c0_i32 = arith.constant 0 : i32
    %c0_i32_0 = arith.constant 0 : i32
    %c0_i32_1 = arith.constant 0 : i32
    return %c0_i32, %c0_i32_0 : i32, i32
  }
  func.func @transform_7(%arg0: i32, %arg1: i32) -> (i32, i32) {
    %c0_i32 = arith.constant 0 : i32
    %c0_i32_0 = arith.constant 0 : i32
    %c0_i32_1 = arith.constant 0 : i32
    return %c0_i32, %c0_i32_0 : i32, i32
  }
  func.func @transform_8(%arg0: i32, %arg1: i32) -> (i32, i32) {
    %c0_i32 = arith.constant 0 : i32
    %c0_i32_0 = arith.constant 0 : i32
    return %arg0, %c0_i32 : i32, i32
  }
}

</mosaic_0001>

<llo_original>
// kernel: gradient_penalty.1
$region0: #{gradient_penalty.1}
  #allocation0 [shape = 'u32[]', space=smem, size = 0x4, offset = 0x4, fixed_abs, tag = 'smem constant byte address 0x4 - core index']
  #allocation1 [shape = 'u32[144,128]{1,0:T(1,128)}', space=vmem, size = 0x12000, scoped, tag = 'internal scratch']
  #allocation2 [shape = 'f32[8,128]{1,0:T(8,128)}', space=vmem, size = 0x1000, scoped, tag = 'scratch operand']
  %s0 = inlined_call_operand.vmem [shape: f32[8,1], index: 0, kind: input, shape index: {}]
  %s1 = inlined_call_operand.vmem [shape: bf16[8,1024], index: 1, kind: input, shape index: {}]
  %s2 = inlined_call_operand.vmem [shape: bf16[8,1024], index: 2, kind: input, shape index: {}]
  %s3 = inlined_call_operand.vmem [shape: bf16[1024,128], index: 3, kind: input, shape index: {}]
  %s4 = inlined_call_operand.vmem [shape: f32[1,128], index: 4, kind: input, shape index: {}]
  %s5 = inlined_call_operand.vmem [shape: f32[1,128], index: 5, kind: input, shape index: {}]
  %s6 = inlined_call_operand.vmem [shape: f32[1,128], index: 6, kind: input, shape index: {}]
  %s7 = inlined_call_operand.vmem [shape: f32[128,128], index: 7, kind: input, shape index: {}]
  %s8 = inlined_call_operand.vmem [shape: f32[8,128], index: 8, kind: output, shape index: {}]
  %s9 = sld [smem:[#allocation0]]
  $region50: #{gradient_penalty.1} parent=0
    _
  %s11 = ssub.s32 1, %s9
  %s12 = scalar_select 0, %s11, %s9
  // Predicated region
  $region2: #{gradient_penalty.1} parent=0 // pred_check
    _
  $region3: #{gradient_penalty.1} parent=0 // pred_check_branch
    %14 = sbr.rel (0) target = $region5
  $region4: #{gradient_penalty.1} parent=0 // pred_region
    _
  $region5: #{gradient_penalty.1} parent=0 // pred_fallthru
    _
  // Predicated region
  $region6: #{gradient_penalty.1} parent=0 // pred_check
    _
  $region7: #{gradient_penalty.1} parent=0 // pred_check_branch
    %16 = sbr.rel (0) target = $region9
  $region8: #{gradient_penalty.1} parent=0 // pred_region
    _
  $region9: #{gradient_penalty.1} parent=0 // pred_fallthru
    _
  // Predicated region
  $region10: #{gradient_penalty.1} parent=0 // pred_check
    _
  $region11: #{gradient_penalty.1} parent=0 // pred_check_branch
    %18 = sbr.rel (0) target = $region13
  $region12: #{gradient_penalty.1} parent=0 // pred_region
    _
  $region13: #{gradient_penalty.1} parent=0 // pred_fallthru
    _
  // Predicated region
  $region14: #{gradient_penalty.1} parent=0 // pred_check
    _
  $region15: #{gradient_penalty.1} parent=0 // pred_check_branch
    %20 = sbr.rel (0) target = $region17
  $region16: #{gradient_penalty.1} parent=0 // pred_region
    _
  $region17: #{gradient_penalty.1} parent=0 // pred_fallthru
    _
  // Predicated region
  $region18: #{gradient_penalty.1} parent=0 // pred_check
    _
  $region19: #{gradient_penalty.1} parent=0 // pred_check_branch
    %22 = sbr.rel (0) target = $region21
  $region20: #{gradient_penalty.1} parent=0 // pred_region
    _
  $region21: #{gradient_penalty.1} parent=0 // pred_fallthru
    _
  // Predicated region
  $region22: #{gradient_penalty.1} parent=0 // pred_check
    _
  $region23: #{gradient_penalty.1} parent=0 // pred_check_branch
    %24 = sbr.rel (0) target = $region25
  $region24: #{gradient_penalty.1} parent=0 // pred_region
    _
  $region25: #{gradient_penalty.1} parent=0 // pred_fallthru
    _
  // Predicated region
  $region26: #{gradient_penalty.1} parent=0 // pred_check
    _
  $region27: #{gradient_penalty.1} parent=0 // pred_check_branch
    %26 = sbr.rel (0) target = $region29
  $region28: #{gradient_penalty.1} parent=0 // pred_region
    _
  $region29: #{gradient_penalty.1} parent=0 // pred_fallthru
    _
  // Predicated region
  $region30: #{gradient_penalty.1} parent=0 // pred_check
    _
  $region31: #{gradient_penalty.1} parent=0 // pred_check_branch
    %28 = sbr.rel (0) target = $region33
  $region32: #{gradient_penalty.1} parent=0 // pred_region
    _
  $region33: #{gradient_penalty.1} parent=0 // pred_fallthru
    _
  %p30 = scmp.eq.s32.totalorder 0, 0
  // Predicated region
  $region34: #{gradient_penalty.1} parent=0 // pred_check
    %p31 = pneg %p30
  $region35: #{gradient_penalty.1} parent=0 // pred_check_branch
    %33 = sbr.rel (%p31) target = $region37
  $region36: #{gradient_penalty.1} parent=0 // pred_region
    %v34 = vld [vmem:[%s4] sm:$0x1]
    %v36 = vlaneseq
    %v37 = vshrl.u32 %v36, 7
    %v38 = vsub.s32 0, %v37
    %v39 = vrot.slane %v34, %v38
    %41 = vst [vmem:[#allocation2] sm:$0xff] %v39
  $region37: #{gradient_penalty.1} parent=0 // pred_fallthru
    _
  %v42 = vld [vmem:[%s0] sm:$0xff]
  %v43 = vld [vmem:[%s1] sm:$0xff]
  %v44 = vld [vmem:[%s1 + $0x8] sm:$0xff]
  %v45 = vld [vmem:[%s1 + $0x10] sm:$0xff]
  %v46 = vld [vmem:[%s1 + $0x18] sm:$0xff]
  %v47 = vunpack.c.l.bf16 %v43
  %v48 = vunpack.c.h.bf16 %v43
  %v49 = vunpack.c.l.bf16 %v44
  %v50 = vunpack.c.h.bf16 %v44
  %v51 = vunpack.c.l.bf16 %v45
  %v52 = vunpack.c.h.bf16 %v45
  %v53 = vunpack.c.l.bf16 %v46
  %v54 = vunpack.c.h.bf16 %v46
  %v55 = vld [vmem:[%s2] sm:$0xff]
  %v56 = vld [vmem:[%s2 + $0x8] sm:$0xff]
  %v57 = vld [vmem:[%s2 + $0x10] sm:$0xff]
  %v58 = vld [vmem:[%s2 + $0x18] sm:$0xff]
  %v59 = vunpack.c.l.bf16 %v55
  %v60 = vunpack.c.h.bf16 %v55
  %v61 = vunpack.c.l.bf16 %v56
  %v62 = vunpack.c.h.bf16 %v56
  %v63 = vunpack.c.l.bf16 %v57
  %v64 = vunpack.c.h.bf16 %v57
  %v65 = vunpack.c.l.bf16 %v58
  %v66 = vunpack.c.h.bf16 %v58
  %68 = vset.pattern.permute.xlu0 0
  %69 = vperm.xlu0 %68, %v42
  %v70 = vpop.permute.xlu0 %69
  %v72 = vmul.f32 %v70, %v47
  %v73 = vmul.f32 %v70, %v48
  %v74 = vmul.f32 %v70, %v49
  %v75 = vmul.f32 %v70, %v50
  %v76 = vmul.f32 %v70, %v51
  %v77 = vmul.f32 %v70, %v52
  %v78 = vmul.f32 %v70, %v53
  %v79 = vmul.f32 %v70, %v54
  %v80 = vsub.f32 1.0, %v42
  %82 = vset.pattern.permute.xlu0 0
  %83 = vperm.xlu0 %82, %v80
  %v84 = vpop.permute.xlu0 %83
  %v86 = vmul.f32 %v84, %v59
  %v87 = vmul.f32 %v84, %v60
  %v88 = vmul.f32 %v84, %v61
  %v89 = vmul.f32 %v84, %v62
  %v90 = vmul.f32 %v84, %v63
  %v91 = vmul.f32 %v84, %v64
  %v92 = vmul.f32 %v84, %v65
  %v93 = vmul.f32 %v84, %v66
  %v94 = vadd.f32 %v72, %v86
  %v95 = vadd.f32 %v73, %v87
  %v96 = vadd.f32 %v74, %v88
  %v97 = vadd.f32 %v75, %v89
  %v98 = vadd.f32 %v76, %v90
  %v99 = vadd.f32 %v77, %v91
  %v100 = vadd.f32 %v78, %v92
  %v101 = vadd.f32 %v79, %v93
  %v102 = vld [vmem:[#allocation2] sm:$0xff]
  %v103 = vpack.c.bf16 %v94, %v94
  %v104 = vpack.c.bf16 %v95, %v95
  %v105 = vpack.c.bf16 %v96, %v96
  %v106 = vpack.c.bf16 %v97, %v97
  %v107 = vpack.c.bf16 %v98, %v98
  %v108 = vpack.c.bf16 %v99, %v99
  %v109 = vpack.c.bf16 %v100, %v100
  %v110 = vpack.c.bf16 %v101, %v101
  %v111 = vld [vmem:[%s3] sm:$0xf]
  %v112 = vld [vmem:[%s3 + $0x4] sm:$0xf]
  %v113 = vld [vmem:[%s3 + $0x8] sm:$0xf]
  %v114 = vld [vmem:[%s3 + $0xc] sm:$0xf]
  %v115 = vld [vmem:[%s3 + $0x10] sm:$0xf]
  %v116 = vld [vmem:[%s3 + $0x14] sm:$0xf]
  %v117 = vld [vmem:[%s3 + $0x18] sm:$0xf]
  %v118 = vld [vmem:[%s3 + $0x1c] sm:$0xf]
  %v119 = vld [vmem:[%s3 + $0x20] sm:$0xf]
  %v120 = vld [vmem:[%s3 + $0x24] sm:$0xf]
  %v121 = vld [vmem:[%s3 + $0x28] sm:$0xf]
  %v122 = vld [vmem:[%s3 + $0x2c] sm:$0xf]
  %v123 = vld [vmem:[%s3 + $0x30] sm:$0xf]
  %v124 = vld [vmem:[%s3 + $0x34] sm:$0xf]
  %v125 = vld [vmem:[%s3 + $0x38] sm:$0xf]
  %v126 = vld [vmem:[%s3 + $0x3c] sm:$0xf]
  %v127 = vld [vmem:[%s3 + $0x40] sm:$0xf]
  %v128 = vld [vmem:[%s3 + $0x44] sm:$0xf]
  %v129 = vld [vmem:[%s3 + $0x48] sm:$0xf]
  %v130 = vld [vmem:[%s3 + $0x4c] sm:$0xf]
  %v131 = vld [vmem:[%s3 + $0x50] sm:$0xf]
  %v132 = vld [vmem:[%s3 + $0x54] sm:$0xf]
  %v133 = vld [vmem:[%s3 + $0x58] sm:$0xf]
  %v134 = vld [vmem:[%s3 + $0x5c] sm:$0xf]
  %v135 = vld [vmem:[%s3 + $0x60] sm:$0xf]
  %v136 = vld [vmem:[%s3 + $0x64] sm:$0xf]
  %v137 = vld [vmem:[%s3 + $0x68] sm:$0xf]
  %v138 = vld [vmem:[%s3 + $0x6c] sm:$0xf]
  %v139 = vld [vmem:[%s3 + $0x70] sm:$0xf]
  %v140 = vld [vmem:[%s3 + $0x74] sm:$0xf]
  %v141 = vld [vmem:[%s3 + $0x78] sm:$0xf]
  %v142 = vld [vmem:[%s3 + $0x7c] sm:$0xf]
  %v143 = vld [vmem:[%s3 + $0x80] sm:$0xf]
  %v144 = vld [vmem:[%s3 + $0x84] sm:$0xf]
  %v145 = vld [vmem:[%s3 + $0x88] sm:$0xf]
  %v146 = vld [vmem:[%s3 + $0x8c] sm:$0xf]
  %v147 = vld [vmem:[%s3 + $0x90] sm:$0xf]
  %v148 = vld [vmem:[%s3 + $0x94] sm:$0xf]
  %v149 = vld [vmem:[%s3 + $0x98] sm:$0xf]
  %v150 = vld [vmem:[%s3 + $0x9c] sm:$0xf]
  %v151 = vld [vmem:[%s3 + $0xa0] sm:$0xf]
  %v152 = vld [vmem:[%s3 + $0xa4] sm:$0xf]
  %v153 = vld [vmem:[%s3 + $0xa8] sm:$0xf]
  %v154 = vld [vmem:[%s3 + $0xac] sm:$0xf]
  %v155 = vld [vmem:[%s3 + $0xb0] sm:$0xf]
  %v156 = vld [vmem:[%s3 + $0xb4] sm:$0xf]
  %v157 = vld [vmem:[%s3 + $0xb8] sm:$0xf]
  %v158 = vld [vmem:[%s3 + $0xbc] sm:$0xf]
  %v159 = vld [vmem:[%s3 + $0xc0] sm:$0xf]
  %v160 = vld [vmem:[%s3 + $0xc4] sm:$0xf]
  %v161 = vld [vmem:[%s3 + $0xc8] sm:$0xf]
  %v162 = vld [vmem:[%s3 + $0xcc] sm:$0xf]
  %v163 = vld [vmem:[%s3 + $0xd0] sm:$0xf]
  %v164 = vld [vmem:[%s3 + $0xd4] sm:$0xf]
  %v165 = vld [vmem:[%s3 + $0xd8] sm:$0xf]
  %v166 = vld [vmem:[%s3 + $0xdc] sm:$0xf]
  %v167 = vld [vmem:[%s3 + $0xe0] sm:$0xf]
  %v168 = vld [vmem:[%s3 + $0xe4] sm:$0xf]
  %v169 = vld [vmem:[%s3 + $0xe8] sm:$0xf]
  %v170 = vld [vmem:[%s3 + $0xec] sm:$0xf]
  %v171 = vld [vmem:[%s3 + $0xf0] sm:$0xf]
  %v172 = vld [vmem:[%s3 + $0xf4] sm:$0xf]
  %v173 = vld [vmem:[%s3 + $0xf8] sm:$0xf]
  %v174 = vld [vmem:[%s3 + $0xfc] sm:$0xf]
  %v175 = vld [vmem:[%s3 + $0x100] sm:$0xf]
  %v176 = vld [vmem:[%s3 + $0x104] sm:$0xf]
  %v177 = vld [vmem:[%s3 + $0x108] sm:$0xf]
  %v178 = vld [vmem:[%s3 + $0x10c] sm:$0xf]
  %v179 = vld [vmem:[%s3 + $0x110] sm:$0xf]
  %v180 = vld [vmem:[%s3 + $0x114] sm:$0xf]
  %v181 = vld [vmem:[%s3 + $0x118] sm:$0xf]
  %v182 = vld [vmem:[%s3 + $0x11c] sm:$0xf]
  %v183 = vld [vmem:[%s3 + $0x120] sm:$0xf]
  %v184 = vld [vmem:[%s3 + $0x124] sm:$0xf]
  %v185 = vld [vmem:[%s3 + $0x128] sm:$0xf]
  %v186 = vld [vmem:[%s3 + $0x12c] sm:$0xf]
  %v187 = vld [vmem:[%s3 + $0x130] sm:$0xf]
  %v188 = vld [vmem:[%s3 + $0x134] sm:$0xf]
  %v189 = vld [vmem:[%s3 + $0x138] sm:$0xf]
  %v190 = vld [vmem:[%s3 + $0x13c] sm:$0xf]
  %v191 = vld [vmem:[%s3 + $0x140] sm:$0xf]
  %v192 = vld [vmem:[%s3 + $0x144] sm:$0xf]
  %v193 = vld [vmem:[%s3 + $0x148] sm:$0xf]
  %v194 = vld [vmem:[%s3 + $0x14c] sm:$0xf]
  %v195 = vld [vmem:[%s3 + $0x150] sm:$0xf]
  %v196 = vld [vmem:[%s3 + $0x154] sm:$0xf]
  %v197 = vld [vmem:[%s3 + $0x158] sm:$0xf]
  %v198 = vld [vmem:[%s3 + $0x15c] sm:$0xf]
  %v199 = vld [vmem:[%s3 + $0x160] sm:$0xf]
  %v200 = vld [vmem:[%s3 + $0x164] sm:$0xf]
  %v201 = vld [vmem:[%s3 + $0x168] sm:$0xf]
  %v202 = vld [vmem:[%s3 + $0x16c] sm:$0xf]
  %v203 = vld [vmem:[%s3 + $0x170] sm:$0xf]
  %v204 = vld [vmem:[%s3 + $0x174] sm:$0xf]
  %v205 = vld [vmem:[%s3 + $0x178] sm:$0xf]
  %v206 = vld [vmem:[%s3 + $0x17c] sm:$0xf]
  %v207 = vld [vmem:[%s3 + $0x180] sm:$0xf]
  %v208 = vld [vmem:[%s3 + $0x184] sm:$0xf]
  %v209 = vld [vmem:[%s3 + $0x188] sm:$0xf]
  %v210 = vld [vmem:[%s3 + $0x18c] sm:$0xf]
  %v211 = vld [vmem:[%s3 + $0x190] sm:$0xf]
  %v212 = vld [vmem:[%s3 + $0x194] sm:$0xf]
  %v213 = vld [vmem:[%s3 + $0x198] sm:$0xf]
  %v214 = vld [vmem:[%s3 + $0x19c] sm:$0xf]
  %v215 = vld [vmem:[%s3 + $0x1a0] sm:$0xf]
  %v216 = vld [vmem:[%s3 + $0x1a4] sm:$0xf]
  %v217 = vld [vmem:[%s3 + $0x1a8] sm:$0xf]
  %v218 = vld [vmem:[%s3 + $0x1ac] sm:$0xf]
  %v219 = vld [vmem:[%s3 + $0x1b0] sm:$0xf]
  %v220 = vld [vmem:[%s3 + $0x1b4] sm:$0xf]
  %v221 = vld [vmem:[%s3 + $0x1b8] sm:$0xf]
  %v222 = vld [vmem:[%s3 + $0x1bc] sm:$0xf]
  %v223 = vld [vmem:[%s3 + $0x1c0] sm:$0xf]
  %v224 = vld [vmem:[%s3 + $0x1c4] sm:$0xf]
  %v225 = vld [vmem:[%s3 + $0x1c8] sm:$0xf]
  %v226 = vld [vmem:[%s3 + $0x1cc] sm:$0xf]
  %v227 = vld [vmem:[%s3 + $0x1d0] sm:$0xf]
  %v228 = vld [vmem:[%s3 + $0x1d4] sm:$0xf]
  %v229 = vld [vmem:[%s3 + $0x1d8] sm:$0xf]
  %v230 = vld [vmem:[%s3 + $0x1dc] sm:$0xf]
  %v231 = vld [vmem:[%s3 + $0x1e0] sm:$0xf]
  %v232 = vld [vmem:[%s3 + $0x1e4] sm:$0xf]
  %v233 = vld [vmem:[%s3 + $0x1e8] sm:$0xf]
  %v234 = vld [vmem:[%s3 + $0x1ec] sm:$0xf]
  %v235 = vld [vmem:[%s3 + $0x1f0] sm:$0xf]
  %v236 = vld [vmem:[%s3 + $0x1f4] sm:$0xf]
  %v237 = vld [vmem:[%s3 + $0x1f8] sm:$0xf]
  %v238 = vld [vmem:[%s3 + $0x1fc] sm:$0xf]
  %v367 = vunpack.c.l.b16 %v111
  %v368 = vunpack.c.l.b16 %v112
  %v369 = vunpack.c.l.b16 %v113
  %v370 = vunpack.c.l.b16 %v114
  %v371 = vunpack.c.l.b16 %v115
  %v372 = vunpack.c.l.b16 %v116
  %v373 = vunpack.c.l.b16 %v117
  %v374 = vunpack.c.l.b16 %v118
  %v375 = vunpack.c.l.b16 %v119
  %v376 = vunpack.c.l.b16 %v120
  %v377 = vunpack.c.l.b16 %v121
  %v378 = vunpack.c.l.b16 %v122
  %v379 = vunpack.c.l.b16 %v123
  %v380 = vunpack.c.l.b16 %v124
  %v381 = vunpack.c.l.b16 %v125
  %v382 = vunpack.c.l.b16 %v126
  %v383 = vunpack.c.l.b16 %v127
  %v384 = vunpack.c.l.b16 %v128
  %v385 = vunpack.c.l.b16 %v129
  %v386 = vunpack.c.l.b16 %v130
  %v387 = vunpack.c.l.b16 %v131
  %v388 = vunpack.c.l.b16 %v132
  %v389 = vunpack.c.l.b16 %v133
  %v390 = vunpack.c.l.b16 %v134
  %v391 = vunpack.c.l.b16 %v135
  %v392 = vunpack.c.l.b16 %v136
  %v393 = vunpack.c.l.b16 %v137
  %v394 = vunpack.c.l.b16 %v138
  %v395 = vunpack.c.l.b16 %v139
  %v396 = vunpack.c.l.b16 %v140
  %v397 = vunpack.c.l.b16 %v141
  %v398 = vunpack.c.l.b16 %v142
  %v399 = vunpack.c.l.b16 %v143
  %v400 = vunpack.c.l.b16 %v144
  %v401 = vunpack.c.l.b16 %v145
  %v402 = vunpack.c.l.b16 %v146
  %v403 = vunpack.c.l.b16 %v147
  %v404 = vunpack.c.l.b16 %v148
  %v405 = vunpack.c.l.b16 %v149
  %v406 = vunpack.c.l.b16 %v150
  %v407 = vunpack.c.l.b16 %v151
  %v408 = vunpack.c.l.b16 %v152
  %v409 = vunpack.c.l.b16 %v153
  %v410 = vunpack.c.l.b16 %v154
  %v411 = vunpack.c.l.b16 %v155
  %v412 = vunpack.c.l.b16 %v156
  %v413 = vunpack.c.l.b16 %v157
  %v414 = vunpack.c.l.b16 %v158
  %v415 = vunpack.c.l.b16 %v159
  %v416 = vunpack.c.l.b16 %v160
  %v417 = vunpack.c.l.b16 %v161
  %v418 = vunpack.c.l.b16 %v162
  %v419 = vunpack.c.l.b16 %v163
  %v420 = vunpack.c.l.b16 %v164
  %v421 = vunpack.c.l.b16 %v165
  %v422 = vunpack.c.l.b16 %v166
  %v423 = vunpack.c.l.b16 %v167
  %v424 = vunpack.c.l.b16 %v168
  %v425 = vunpack.c.l.b16 %v169
  %v426 = vunpack.c.l.b16 %v170
  %v427 = vunpack.c.l.b16 %v171
  %v428 = vunpack.c.l.b16 %v172
  %v429 = vunpack.c.l.b16 %v173
  %v430 = vunpack.c.l.b16 %v174
  %v431 = vunpack.c.l.b16 %v175
  %v432 = vunpack.c.l.b16 %v176
  %v433 = vunpack.c.l.b16 %v177
  %v434 = vunpack.c.l.b16 %v178
  %v435 = vunpack.c.l.b16 %v179
  %v436 = vunpack.c.l.b16 %v180
  %v437 = vunpack.c.l.b16 %v181
  %v438 = vunpack.c.l.b16 %v182
  %v439 = vunpack.c.l.b16 %v183
  %v440 = vunpack.c.l.b16 %v184
  %v441 = vunpack.c.l.b16 %v185
  %v442 = vunpack.c.l.b16 %v186
  %v443 = vunpack.c.l.b16 %v187
  %v444 = vunpack.c.l.b16 %v188
  %v445 = vunpack.c.l.b16 %v189
  %v446 = vunpack.c.l.b16 %v190
  %v447 = vunpack.c.l.b16 %v191
  %v448 = vunpack.c.l.b16 %v192
  %v449 = vunpack.c.l.b16 %v193
  %v450 = vunpack.c.l.b16 %v194
  %v451 = vunpack.c.l.b16 %v195
  %v452 = vunpack.c.l.b16 %v196
  %v453 = vunpack.c.l.b16 %v197
  %v454 = vunpack.c.l.b16 %v198
  %v455 = vunpack.c.l.b16 %v199
  %v456 = vunpack.c.l.b16 %v200
  %v457 = vunpack.c.l.b16 %v201
  %v458 = vunpack.c.l.b16 %v202
  %v459 = vunpack.c.l.b16 %v203
  %v460 = vunpack.c.l.b16 %v204
  %v461 = vunpack.c.l.b16 %v205
  %v462 = vunpack.c.l.b16 %v206
  %v463 = vunpack.c.l.b16 %v207
  %v464 = vunpack.c.l.b16 %v208
  %v465 = vunpack.c.l.b16 %v209
  %v466 = vunpack.c.l.b16 %v210
  %v467 = vunpack.c.l.b16 %v211
  %v468 = vunpack.c.l.b16 %v212
  %v469 = vunpack.c.l.b16 %v213
  %v470 = vunpack.c.l.b16 %v214
  %v471 = vunpack.c.l.b16 %v215
  %v472 = vunpack.c.l.b16 %v216
  %v473 = vunpack.c.l.b16 %v217
  %v474 = vunpack.c.l.b16 %v218
  %v475 = vunpack.c.l.b16 %v219
  %v476 = vunpack.c.l.b16 %v220
  %v477 = vunpack.c.l.b16 %v221
  %v478 = vunpack.c.l.b16 %v222
  %v479 = vunpack.c.l.b16 %v223
  %v480 = vunpack.c.l.b16 %v224
  %v481 = vunpack.c.l.b16 %v225
  %v482 = vunpack.c.l.b16 %v226
  %v483 = vunpack.c.l.b16 %v227
  %v484 = vunpack.c.l.b16 %v228
  %v485 = vunpack.c.l.b16 %v229
  %v486 = vunpack.c.l.b16 %v230
  %v487 = vunpack.c.l.b16 %v231
  %v488 = vunpack.c.l.b16 %v232
  %v489 = vunpack.c.l.b16 %v233
  %v490 = vunpack.c.l.b16 %v234
  %v491 = vunpack.c.l.b16 %v235
  %v492 = vunpack.c.l.b16 %v236
  %v493 = vunpack.c.l.b16 %v237
  %v494 = vunpack.c.l.b16 %v238
  %v495 = vpack.c.b16 %v368, %v367
  %v496 = vpack.c.b16 %v370, %v369
  %v497 = vpack.c.b16 %v372, %v371
  %v498 = vpack.c.b16 %v374, %v373
  %v499 = vpack.c.b16 %v376, %v375
  %v500 = vpack.c.b16 %v378, %v377
  %v501 = vpack.c.b16 %v380, %v379
  %v502 = vpack.c.b16 %v382, %v381
  %v503 = vpack.c.b16 %v384, %v383
  %v504 = vpack.c.b16 %v386, %v385
  %v505 = vpack.c.b16 %v388, %v387
  %v506 = vpack.c.b16 %v390, %v389
  %v507 = vpack.c.b16 %v392, %v391
  %v508 = vpack.c.b16 %v394, %v393
  %v509 = vpack.c.b16 %v396, %v395
  %v510 = vpack.c.b16 %v398, %v397
  %v511 = vpack.c.b16 %v400, %v399
  %v512 = vpack.c.b16 %v402, %v401
  %v513 = vpack.c.b16 %v404, %v403
  %v514 = vpack.c.b16 %v406, %v405
  %v515 = vpack.c.b16 %v408, %v407
  %v516 = vpack.c.b16 %v410, %v409
  %v517 = vpack.c.b16 %v412, %v411
  %v518 = vpack.c.b16 %v414, %v413
  %v519 = vpack.c.b16 %v416, %v415
  %v520 = vpack.c.b16 %v418, %v417
  %v521 = vpack.c.b16 %v420, %v419
  %v522 = vpack.c.b16 %v422, %v421
  %v523 = vpack.c.b16 %v424, %v423
  %v524 = vpack.c.b16 %v426, %v425
  %v525 = vpack.c.b16 %v428, %v427
  %v526 = vpack.c.b16 %v430, %v429
  %v527 = vpack.c.b16 %v432, %v431
  %v528 = vpack.c.b16 %v434, %v433
  %v529 = vpack.c.b16 %v436, %v435
  %v530 = vpack.c.b16 %v438, %v437
  %v531 = vpack.c.b16 %v440, %v439
  %v532 = vpack.c.b16 %v442, %v441
  %v533 = vpack.c.b16 %v444, %v443
  %v534 = vpack.c.b16 %v446, %v445
  %v535 = vpack.c.b16 %v448, %v447
  %v536 = vpack.c.b16 %v450, %v449
  %v537 = vpack.c.b16 %v452, %v451
  %v538 = vpack.c.b16 %v454, %v453
  %v539 = vpack.c.b16 %v456, %v455
  %v540 = vpack.c.b16 %v458, %v457
  %v541 = vpack.c.b16 %v460, %v459
  %v542 = vpack.c.b16 %v462, %v461
  %v543 = vpack.c.b16 %v464, %v463
  %v544 = vpack.c.b16 %v466, %v465
  %v545 = vpack.c.b16 %v468, %v467
  %v546 = vpack.c.b16 %v470, %v469
  %v547 = vpack.c.b16 %v472, %v471
  %v548 = vpack.c.b16 %v474, %v473
  %v549 = vpack.c.b16 %v476, %v475
  %v550 = vpack.c.b16 %v478, %v477
  %v551 = vpack.c.b16 %v480, %v479
  %v552 = vpack.c.b16 %v482, %v481
  %v553 = vpack.c.b16 %v484, %v483
  %v554 = vpack.c.b16 %v486, %v485
  %v555 = vpack.c.b16 %v488, %v487
  %v556 = vpack.c.b16 %v490, %v489
  %v557 = vpack.c.b16 %v492, %v491
  %v558 = vpack.c.b16 %v494, %v493
  %623 = vmatprep.subr.bf16.mxu0 0
  %624 = vmatpush1.bf16.msra.mxu0 %v495
  %625 = vmatprep.subr.bf16.mxu0 0
  %626 = vmatpush1.bf16.msra.mxu0 %v496
  %627 = vmatprep.subr.bf16.mxu0 0
  %628 = vmatpush1.bf16.msra.mxu0 %v497
  %629 = vmatprep.subr.bf16.mxu0 0
  %630 = vmatpush1.bf16.msra.mxu0 %v498
  %631 = vmatprep.subr.bf16.mxu0 0
  %632 = vmatpush1.bf16.msra.mxu0 %v499
  %633 = vmatprep.subr.bf16.mxu0 0
  %634 = vmatpush1.bf16.msra.mxu0 %v500
  %635 = vmatprep.subr.bf16.mxu0 0
  %636 = vmatpush1.bf16.msra.mxu0 %v501
  %637 = vmatprep.subr.bf16.mxu0 0
  %638 = vmatpush1.bf16.msra.mxu0 %v502
  %639 = vmatprep.subr.bf16.mxu0 0
  %640 = vmatpush1.bf16.msra.mxu0 %v503
  %641 = vmatprep.subr.bf16.mxu0 0
  %642 = vmatpush1.bf16.msra.mxu0 %v504
  %643 = vmatprep.subr.bf16.mxu0 0
  %644 = vmatpush1.bf16.msra.mxu0 %v505
  %645 = vmatprep.subr.bf16.mxu0 0
  %646 = vmatpush1.bf16.msra.mxu0 %v506
  %647 = vmatprep.subr.bf16.mxu0 0
  %648 = vmatpush1.bf16.msra.mxu0 %v507
  %649 = vmatprep.subr.bf16.mxu0 0
  %650 = vmatpush1.bf16.msra.mxu0 %v508
  %651 = vmatprep.subr.bf16.mxu0 0
  %652 = vmatpush1.bf16.msra.mxu0 %v509
  %653 = vmatprep.subr.bf16.mxu0 0
  %654 = vmatpush1.bf16.msra.mxu0 %v510
  %655 = vmatprep.mubr.bf16.mxu0 %v104
  %656 = vmatmul.mubr.bf16.gmra.mrb[0].mxu0 %v103
  %v657 = vpop.f32.mrb[0].mxu0
  %v658 = vadd.f32 0.0, %v657
  %v659 = vpop.f32.mrb[0].mxu0
  %v660 = vpop.f32.mrb[0].mxu0
  %v661 = vpop.f32.mrb[0].mxu0
  %662 = vdwg.mxu0
  %663 = vmatprep.subr.bf16.mxu0 0
  %664 = vmatpush1.bf16.msra.mxu0 %v511
  %665 = vmatprep.subr.bf16.mxu0 0
  %666 = vmatpush1.bf16.msra.mxu0 %v512
  %667 = vmatprep.subr.bf16.mxu0 0
  %668 = vmatpush1.bf16.msra.mxu0 %v513
  %669 = vmatprep.subr.bf16.mxu0 0
  %670 = vmatpush1.bf16.msra.mxu0 %v514
  %671 = vmatprep.subr.bf16.mxu0 0
  %672 = vmatpush1.bf16.msra.mxu0 %v515
  %673 = vmatprep.subr.bf16.mxu0 0
  %674 = vmatpush1.bf16.msra.mxu0 %v516
  %675 = vmatprep.subr.bf16.mxu0 0
  %676 = vmatpush1.bf16.msra.mxu0 %v517
  %677 = vmatprep.subr.bf16.mxu0 0
  %678 = vmatpush1.bf16.msra.mxu0 %v518
  %679 = vmatprep.subr.bf16.mxu0 0
  %680 = vmatpush1.bf16.msra.mxu0 %v519
  %681 = vmatprep.subr.bf16.mxu0 0
  %682 = vmatpush1.bf16.msra.mxu0 %v520
  %683 = vmatprep.subr.bf16.mxu0 0
  %684 = vmatpush1.bf16.msra.mxu0 %v521
  %685 = vmatprep.subr.bf16.mxu0 0
  %686 = vmatpush1.bf16.msra.mxu0 %v522
  %687 = vmatprep.subr.bf16.mxu0 0
  %688 = vmatpush1.bf16.msra.mxu0 %v523
  %689 = vmatprep.subr.bf16.mxu0 0
  %690 = vmatpush1.bf16.msra.mxu0 %v524
  %691 = vmatprep.subr.bf16.mxu0 0
  %692 = vmatpush1.bf16.msra.mxu0 %v525
  %693 = vmatprep.subr.bf16.mxu0 0
  %694 = vmatpush1.bf16.msra.mxu0 %v526
  %695 = vmatprep.mubr.bf16.mxu0 %v106
  %696 = vmatmul.mubr.bf16.gmra.mrb[0].mxu0 %v105
  %v697 = vpop.f32.mrb[0].mxu0
  %v698 = vadd.f32 %v658, %v697
  %v699 = vpop.f32.mrb[0].mxu0
  %v700 = vpop.f32.mrb[0].mxu0
  %v701 = vpop.f32.mrb[0].mxu0
  %702 = vdwg.mxu0
  %703 = vmatprep.subr.bf16.mxu0 0
  %704 = vmatpush1.bf16.msra.mxu0 %v527
  %705 = vmatprep.subr.bf16.mxu0 0
  %706 = vmatpush1.bf16.msra.mxu0 %v528
  %707 = vmatprep.subr.bf16.mxu0 0
  %708 = vmatpush1.bf16.msra.mxu0 %v529
  %709 = vmatprep.subr.bf16.mxu0 0
  %710 = vmatpush1.bf16.msra.mxu0 %v530
  %711 = vmatprep.subr.bf16.mxu0 0
  %712 = vmatpush1.bf16.msra.mxu0 %v531
  %713 = vmatprep.subr.bf16.mxu0 0
  %714 = vmatpush1.bf16.msra.mxu0 %v532
  %715 = vmatprep.subr.bf16.mxu0 0
  %716 = vmatpush1.bf16.msra.mxu0 %v533
  %717 = vmatprep.subr.bf16.mxu0 0
  %718 = vmatpush1.bf16.msra.mxu0 %v534
  %719 = vmatprep.subr.bf16.mxu0 0
  %720 = vmatpush1.bf16.msra.mxu0 %v535
  %721 = vmatprep.subr.bf16.mxu0 0
  %722 = vmatpush1.bf16.msra.mxu0 %v536
  %723 = vmatprep.subr.bf16.mxu0 0
  %724 = vmatpush1.bf16.msra.mxu0 %v537
  %725 = vmatprep.subr.bf16.mxu0 0
  %726 = vmatpush1.bf16.msra.mxu0 %v538
  %727 = vmatprep.subr.bf16.mxu0 0
  %728 = vmatpush1.bf16.msra.mxu0 %v539
  %729 = vmatprep.subr.bf16.mxu0 0
  %730 = vmatpush1.bf16.msra.mxu0 %v540
  %731 = vmatprep.subr.bf16.mxu0 0
  %732 = vmatpush1.bf16.msra.mxu0 %v541
  %733 = vmatprep.subr.bf16.mxu0 0
  %734 = vmatpush1.bf16.msra.mxu0 %v542
  %735 = vmatprep.mubr.bf16.mxu0 %v108
  %736 = vmatmul.mubr.bf16.gmra.mrb[0].mxu0 %v107
  %v737 = vpop.f32.mrb[0].mxu0
  %v738 = vadd.f32 %v698, %v737
  %v739 = vpop.f32.mrb[0].mxu0
  %v740 = vpop.f32.mrb[0].mxu0
  %v741 = vpop.f32.mrb[0].mxu0
  %742 = vdwg.mxu0
  %743 = vmatprep.subr.bf16.mxu0 0
  %744 = vmatpush1.bf16.msra.mxu0 %v543
  %745 = vmatprep.subr.bf16.mxu0 0
  %746 = vmatpush1.bf16.msra.mxu0 %v544
  %747 = vmatprep.subr.bf16.mxu0 0
  %748 = vmatpush1.bf16.msra.mxu0 %v545
  %749 = vmatprep.subr.bf16.mxu0 0
  %750 = vmatpush1.bf16.msra.mxu0 %v546
  %751 = vmatprep.subr.bf16.mxu0 0
  %752 = vmatpush1.bf16.msra.mxu0 %v547
  %753 = vmatprep.subr.bf16.mxu0 0
  %754 = vmatpush1.bf16.msra.mxu0 %v548
  %755 = vmatprep.subr.bf16.mxu0 0
  %756 = vmatpush1.bf16.msra.mxu0 %v549
  %757 = vmatprep.subr.bf16.mxu0 0
  %758 = vmatpush1.bf16.msra.mxu0 %v550
  %759 = vmatprep.subr.bf16.mxu0 0
  %760 = vmatpush1.bf16.msra.mxu0 %v551
  %761 = vmatprep.subr.bf16.mxu0 0
  %762 = vmatpush1.bf16.msra.mxu0 %v552
  %763 = vmatprep.subr.bf16.mxu0 0
  %764 = vmatpush1.bf16.msra.mxu0 %v553
  %765 = vmatprep.subr.bf16.mxu0 0
  %766 = vmatpush1.bf16.msra.mxu0 %v554
  %767 = vmatprep.subr.bf16.mxu0 0
  %768 = vmatpush1.bf16.msra.mxu0 %v555
  %769 = vmatprep.subr.bf16.mxu0 0
  %770 = vmatpush1.bf16.msra.mxu0 %v556
  %771 = vmatprep.subr.bf16.mxu0 0
  %772 = vmatpush1.bf16.msra.mxu0 %v557
  %773 = vmatprep.subr.bf16.mxu0 0
  %774 = vmatpush1.bf16.msra.mxu0 %v558
  %775 = vmatprep.mubr.bf16.mxu0 %v110
  %776 = vmatmul.mubr.bf16.gmra.mrb[0].mxu0 %v109
  %v777 = vpop.f32.mrb[0].mxu0
  %v778 = vadd.f32 %v738, %v777
  %v779 = vpop.f32.mrb[0].mxu0
  %v780 = vpop.f32.mrb[0].mxu0
  %v781 = vpop.f32.mrb[0].mxu0
  %782 = vdwg.mxu0
  %v783 = vadd.f32 %v102, %v778
  %784 = vst [vmem:[#allocation2] sm:$0xff] %v783
  // Predicated region
  $region38: #{gradient_penalty.1} parent=0 // pred_check
    %p785 = pneg %p30
  $region39: #{gradient_penalty.1} parent=0 // pred_check_branch
    %787 = sbr.rel (%p785) target = $region41
  $region40: #{gradient_penalty.1} parent=0 // pred_region
    %v788 = vld [vmem:[#allocation2] sm:$0xff]
    %vm789 = vcmp.gt.f32.partialorder %v788, 0.0
    %v790 = vld [vmem:[%s5] sm:$0x1]
    %v791 = vld [vmem:[%s6] sm:$0x1]
    %v793 = vlaneseq
    %v794 = vshrl.u32 %v793, 7
    %v795 = vsub.s32 0, %v794
    %v796 = vrot.slane %v790, %v795
    %v799 = vlaneseq
    %v800 = vshrl.u32 %v799, 7
    %v801 = vsub.s32 0, %v800
    %v802 = vrot.slane %v791, %v801
    %v804 = vsel %vm789, %v796, %v802
    %v805 = vld [vmem:[%s7] sm:$0xff]
    %v806 = vld [vmem:[%s7 + $0x8] sm:$0xff]
    %v807 = vld [vmem:[%s7 + $0x10] sm:$0xff]
    %v808 = vld [vmem:[%s7 + $0x18] sm:$0xff]
    %v809 = vld [vmem:[%s7 + $0x20] sm:$0xff]
    %v810 = vld [vmem:[%s7 + $0x28] sm:$0xff]
    %v811 = vld [vmem:[%s7 + $0x30] sm:$0xff]
    %v812 = vld [vmem:[%s7 + $0x38] sm:$0xff]
    %v813 = vld [vmem:[%s7 + $0x40] sm:$0xff]
    %v814 = vld [vmem:[%s7 + $0x48] sm:$0xff]
    %v815 = vld [vmem:[%s7 + $0x50] sm:$0xff]
    %v816 = vld [vmem:[%s7 + $0x58] sm:$0xff]
    %v817 = vld [vmem:[%s7 + $0x60] sm:$0xff]
    %v818 = vld [vmem:[%s7 + $0x68] sm:$0xff]
    %v819 = vld [vmem:[%s7 + $0x70] sm:$0xff]
    %v820 = vld [vmem:[%s7 + $0x78] sm:$0xff]
    %821 = vmatprep.subr.mxu0 0.0
    %822 = vmatpush1.msra.mxu0 %v805
    %823 = vmatprep.subr.mxu0 0.0
    %824 = vmatpush1.msra.mxu0 %v806
    %825 = vmatprep.subr.mxu0 0.0
    %826 = vmatpush1.msra.mxu0 %v807
    %827 = vmatprep.subr.mxu0 0.0
    %828 = vmatpush1.msra.mxu0 %v808
    %829 = vmatprep.subr.mxu0 0.0
    %830 = vmatpush1.msra.mxu0 %v809
    %831 = vmatprep.subr.mxu0 0.0
    %832 = vmatpush1.msra.mxu0 %v810
    %833 = vmatprep.subr.mxu0 0.0
    %834 = vmatpush1.msra.mxu0 %v811
    %835 = vmatprep.subr.mxu0 0.0
    %836 = vmatpush1.msra.mxu0 %v812
    %837 = vmatprep.subr.mxu0 0.0
    %838 = vmatpush1.msra.mxu0 %v813
    %839 = vmatprep.subr.mxu0 0.0
    %840 = vmatpush1.msra.mxu0 %v814
    %841 = vmatprep.subr.mxu0 0.0
    %842 = vmatpush1.msra.mxu0 %v815
    %843 = vmatprep.subr.mxu0 0.0
    %844 = vmatpush1.msra.mxu0 %v816
    %845 = vmatprep.subr.mxu0 0.0
    %846 = vmatpush1.msra.mxu0 %v817
    %847 = vmatprep.subr.mxu0 0.0
    %848 = vmatpush1.msra.mxu0 %v818
    %849 = vmatprep.subr.mxu0 0.0
    %850 = vmatpush1.msra.mxu0 %v819
    %851 = vmatprep.subr.mxu0 0.0
    %852 = vmatpush1.msra.mxu0 %v820
    %853 = vmatprep.subr.mxu0 0.0
    %854 = vmatpush1.msra.mxu0 0.0
    %855 = vmatprep.subr.mxu0 0.0
    %856 = vmatpush1.msra.mxu0 0.0
    %857 = vmatprep.subr.mxu0 0.0
    %858 = vmatpush1.msra.mxu0 0.0
    %859 = vmatprep.subr.mxu0 0.0
    %860 = vmatpush1.msra.mxu0 0.0
    %861 = vmatprep.subr.mxu0 0.0
    %862 = vmatpush1.msra.mxu0 0.0
    %863 = vmatprep.subr.mxu0 0.0
    %864 = vmatpush1.msra.mxu0 0.0
    %865 = vmatprep.subr.mxu0 0.0
    %866 = vmatpush1.msra.mxu0 0.0
    %867 = vmatprep.subr.mxu0 0.0
    %868 = vmatpush1.msra.mxu0 0.0
    %869 = vmatprep.subr.mxu0 0.0
    %870 = vmatpush1.msra.mxu0 0.0
    %871 = vmatprep.subr.mxu0 0.0
    %872 = vmatpush1.msra.mxu0 0.0
    %873 = vmatprep.subr.mxu0 0.0
    %874 = vmatpush1.msra.mxu0 0.0
    %875 = vmatprep.subr.mxu0 0.0
    %876 = vmatpush1.msra.mxu0 0.0
    %877 = vmatprep.subr.mxu0 0.0
    %878 = vmatpush1.msra.mxu0 0.0
    %879 = vmatprep.subr.mxu0 0.0
    %880 = vmatpush1.msra.mxu0 0.0
    %881 = vmatprep.subr.mxu0 0.0
    %882 = vmatpush1.msra.mxu0 0.0
    %883 = vmatprep.subr.mxu0 0.0
    %884 = vmatpush1.msra.mxu0 0.0
    %885 = vmatprep.mubr.f32.mxu0 0.0
    %886 = vmatmul.mubr.f32.gmra.mrb[0].mxu0 %v804
    %v887 = vpop.f32.mrb[0].mxu0
    %v888 = vadd.f32 0.0, %v887
    %v889 = vpop.f32.mrb[0].mxu0
    %890 = vdwg.mxu0
    %v891 = vmul.f32 %v888, %v804
    %892 = vadd.xlane.f32.xlu0 %v891
    %v893 = vpop.xlane.xlu0 %892
    %v894 = vadd.f32 %v893, 1e-12
    %v895 = vrsqrt.pop %v894
    %v896 = vmul.f32 %v894, %v895
    %vm897 = vcmp.eq.f32.partialorder %v894, inf
    %v898 = vsel %vm897, %v894, %v896
    %vm899 = vcmp.eq.f32.partialorder %v894, 0.0
    %v900 = vand.u32 %v894, 2147483648
    %v901 = vsel %vm899, %v900, %v898
    %v902 = vsub.f32 %v901, 1.0
    %v903 = vmul.f32 %v902, %v902
    %904 = vst [vmem:[%s8] sm:$0xff] %v903
  $region41: #{gradient_penalty.1} parent=0 // pred_fallthru
    _
  // Predicated region
  $region42: #{gradient_penalty.1} parent=0 // pred_check
    _
  $region43: #{gradient_penalty.1} parent=0 // pred_check_branch
    %906 = sbr.rel (0) target = $region45
  $region44: #{gradient_penalty.1} parent=0 // pred_region
    _
  $region45: #{gradient_penalty.1} parent=0 // pred_fallthru
    _
  // Predicated region
  $region46: #{gradient_penalty.1} parent=0 // pred_check
    _
  $region47: #{gradient_penalty.1} parent=0 // pred_check_branch
    %908 = sbr.rel (0) target = $region49
  $region48: #{gradient_penalty.1} parent=0 // pred_region
    _
  $region49: #{gradient_penalty.1} parent=0 // pred_fallthru
    _

</llo_original>
